<compile_context>
chip_gen: v7x
topology: tpu7x:2x2x1
jax: 0.10.0
libtpu: 0.0.40
codegen_flags: <defaults>
</compile_context>

<pallas_src>
import math

import jax
import jax.numpy as jnp
from jax import lax
from jax.experimental import pallas as pl
from jax.experimental.pallas import tpu as pltpu

_LANES = 128
_SUBLANES = 8
_N_MOMENTS = 5                          # Sx, Sy, Sxy, Sxx, Syy
_ACC_ROWS = _N_MOMENTS * _SUBLANES      # 40 sublane rows of per-lane partials
_TARGET_TILE_BYTES = 2 * 1024 * 1024    # ~2 MiB of HBM per input per grid step


def _round_up(x, m):
    return ((x + m - 1) // m) * m


def _default_num_cores():
    """2 on v7x (2 TensorCores/chip, shardable via CORE_PARALLEL), else 1."""
    try:
        kind = jax.devices()[0].device_kind.lower()
    except Exception:
        return 1
    return 2 if "v7" in kind else 1


def _make_ncc_moments_kernel(*, rows, tile_rows, tiles_per_core, chunk, unroll,
                             needs_mask):
    """Streaming raw-moment kernel for one fixed static tiling."""
    n_chunks = tile_rows // chunk

    def kernel(x_ref, y_ref, acc_ref):
        # x_ref, y_ref: (tile_rows, 128) input tiles in their native dtype.
        # acc_ref: (40, 128) f32 output block, resident across grid axis 1:
        #   sublanes [0:8)=Sx [8:16)=Sy [16:24)=Sxy [24:32)=Sxx [32:40)=Syy
        core = pl.program_id(0)
        tile = pl.program_id(1)

        @pl.when(tile == 0)
        def _init():
            acc_ref[...] = jnp.zeros_like(acc_ref)

        def accumulate(masked):
            def do():
                # Load the resident accumulator once per grid step,
                # carry it in registers, store once at the end.
                sx = acc_ref[0:8, :]
                sy = acc_ref[8:16, :]
                sxy = acc_ref[16:24, :]
                sxx = acc_ref[24:32, :]
                syy = acc_ref[32:40, :]

                if masked:
                    tile_start = (core * tiles_per_core + tile) * tile_rows
                    valid = jnp.clip(rows - tile_start, 0, tile_rows)
                    row_ids = lax.broadcasted_iota(jnp.int32, (chunk, _LANES), 0)

                def body(k, carry):
                    sx, sy, sxy, sxx, syy = carry
                    r = pl.multiple_of(k * chunk, chunk)
                    x = x_ref[pl.ds(r, chunk), :].astype(jnp.float32)
                    y = y_ref[pl.ds(r, chunk), :].astype(jnp.float32)
                    if masked:
                        keep = (row_ids + r) < valid
                        x = jnp.where(keep, x, 0.0)
                        y = jnp.where(keep, y, 0.0)
                    x3 = x.reshape(chunk // _SUBLANES, _SUBLANES, _LANES)
                    y3 = y.reshape(chunk // _SUBLANES, _SUBLANES, _LANES)
                    # Per-lane vector partials: pure VPU adds, no XLU reduce.
                    sx = sx + jnp.sum(x3, axis=0)
                    sy = sy + jnp.sum(y3, axis=0)
                    sxy = sxy + jnp.sum(x3 * y3, axis=0)
                    sxx = sxx + jnp.sum(x3 * x3, axis=0)
                    syy = syy + jnp.sum(y3 * y3, axis=0)
                    return sx, sy, sxy, sxx, syy

                sx, sy, sxy, sxx, syy = lax.fori_loop(
                    0, n_chunks, body, (sx, sy, sxy, sxx, syy), unroll=unroll)

                acc_ref[0:8, :] = sx
                acc_ref[8:16, :] = sy
                acc_ref[16:24, :] = sxy
                acc_ref[24:32, :] = sxx
                acc_ref[32:40, :] = syy

            return do

        if needs_mask:
            tile_start = (core * tiles_per_core + tile) * tile_rows
            tile_full = (tile_start + tile_rows) <= rows
            pl.when(tile_full)(accumulate(masked=False))
            pl.when(jnp.logical_not(tile_full))(accumulate(masked=True))
        else:
            accumulate(masked=False)()

    return kernel


def ncc_loss(X, Y, *, tile_rows=None, num_cores=None, buffering=2):
    """Pallas TPU implementation of NCCLoss.forward(X, Y) -> scalar float32."""
    assert X.shape == Y.shape, "X and Y must have the same shape"
    n = math.prod(X.shape)
    assert n >= 1

    if num_cores is None:
        num_cores = _default_num_cores()

    itemsize = max(jnp.dtype(X.dtype).itemsize, jnp.dtype(Y.dtype).itemsize)
    if tile_rows is None:
        # ~2 MiB of HBM bytes per input per grid step: 4096 rows for f32,
        # 8192 rows for bf16.
        tile_rows = max(_SUBLANES, _TARGET_TILE_BYTES // (_LANES * itemsize))

    rows = pl.cdiv(n, _LANES)                      # valid 128-lane rows
    rows_per_core = pl.cdiv(rows, num_cores)
    tiles_per_core = pl.cdiv(rows_per_core, tile_rows)
    tr = _round_up(pl.cdiv(rows_per_core, tiles_per_core), _SUBLANES)
    chunk = next(c for c in (32, 16, 8) if tr % c == 0)
    unroll = max(1, min(4, tr // chunk))
    needs_mask = (num_cores * tiles_per_core * tr) != rows

    def to2d(a):
        # Native dtype through the DMA; the reshape is free.  Only a
        # non-multiple-of-128 element count forces a pad (<=127 zeros, which
        # contribute 0 to every raw moment).
        # TODO(synk): that remaining pad-copy could also be removed with an
        # in-kernel lane mask on the final row.
        flat = jnp.ravel(a)
        lane_pad = rows * _LANES - n
        if lane_pad:
            flat = jnp.pad(flat, (0, lane_pad))
        return flat.reshape(rows, _LANES)

    x2d = to2d(X)
    y2d = to2d(Y)

    kernel = _make_ncc_moments_kernel(
        rows=rows, tile_rows=tr, tiles_per_core=tiles_per_core, chunk=chunk,
        unroll=unroll, needs_mask=needs_mask)

    # Clamp the input block index so a (masked-out) tail tile never points a
    # DMA fully past the end of the array.
    last_block = pl.cdiv(rows, tr) - 1
    in_map = lambda c, i: (jnp.minimum(c * tiles_per_core + i, last_block), 0)
    spec_kwargs = {}
    if buffering != 2:
        spec_kwargs["pipeline_mode"] = pl.Buffered(buffering)
    in_spec = pl.BlockSpec((tr, _LANES), in_map, **spec_kwargs)

    if num_cores > 1:
        # Real 2-TensorCore split (v7x); plain "parallel" would just serialize.
        semantics = (pltpu.CORE_PARALLEL, pltpu.ARBITRARY)
    else:
        semantics = (pltpu.ARBITRARY, pltpu.ARBITRARY)

    acc = pl.pallas_call(
        kernel,
        out_shape=jax.ShapeDtypeStruct((num_cores * _ACC_ROWS, _LANES),
                                       jnp.float32),
        grid_spec=pltpu.PrefetchScalarGridSpec(
            num_scalar_prefetch=0,
            grid=(num_cores, tiles_per_core),
            in_specs=[in_spec, in_spec],
            out_specs=pl.BlockSpec((_ACC_ROWS, _LANES), lambda c, i: (c, 0)),
        ),
        compiler_params=pltpu.CompilerParams(dimension_semantics=semantics),
    )(x2d, y2d)

    # Tiny epilogue: combine per-core / per-lane partials and finalize scalar.
    acc = acc.reshape(num_cores, _N_MOMENTS, _SUBLANES, _LANES)
    s = jnp.sum(acc, axis=(0, 2, 3))               # (5,) = [Sx,Sy,Sxy,Sxx,Syy]
    sx, sy, sxy, sxx, syy = s[0], s[1], s[2], s[3], s[4]
    n_f = jnp.float32(n)
    cross_corr = sxy - sx * sy / n_f
    var_x = sxx - sx * sx / n_f
    var_y = syy - sy * sy / n_f
    # TODO(synk): the PyTorch reference divides by std1*std2 with no epsilon
    # (constant inputs -> NaN) and this single-pass raw-moment finalize can
    # cancel badly when |mean| >> std; a two-pass variant would fix the latter
    # at the cost of a second full read of both inputs.
    return 1.0 - cross_corr / (jnp.sqrt(var_x) * jnp.sqrt(var_y))


def _ncc_loss_ref(X, Y):
    # Pure-JAX reference mirroring the PyTorch module (two-pass).
    mean1 = jnp.mean(X)
    mean2 = jnp.mean(Y)
    cross_corr = jnp.sum((X - mean1) * (Y - mean2))
    std1 = jnp.sqrt(jnp.sum((X - mean1) ** 2))
    std2 = jnp.sqrt(jnp.sum((Y - mean2) ** 2))
    return 1.0 - cross_corr / (std1 * std2)


if __name__ == "__main__":
    key = jax.random.PRNGKey(0)
    k1, k2, k3, k4 = jax.random.split(key, 4)

    # Primary check: NCHW feature maps with a non-zero mean (stresses the
    # raw-moment cancellation path); n is a multiple of 128 -> fully aligned
    # streaming path, no padding.
    x = 3.0 + jax.random.normal(k1, (2, 4, 16, 16), dtype=jnp.float32)
    y = 0.5 * x + 0.5 * jax.random.normal(k2, (2, 4, 16, 16), dtype=jnp.float32)
    loss = jax.block_until_ready(ncc_loss(x, y))
    ref = _ncc_loss_ref(x, y)
    assert jnp.allclose(loss, ref, atol=1e-4, rtol=1e-4), (loss, ref)

    # Secondary check: ragged element count (not a multiple of 128 or of the
    # tile) -> exercises the lane pad + in-kernel tail-mask path.
    xr = 1.0 + jax.random.normal(k3, (2, 3, 11, 13), dtype=jnp.float32)
    yr = 0.25 * xr + jax.random.normal(k4, (2, 3, 11, 13), dtype=jnp.float32)
    loss_r = jax.block_until_ready(ncc_loss(xr, yr))
    ref_r = _ncc_loss_ref(xr, yr)
    assert jnp.allclose(loss_r, ref_r, atol=1e-4, rtol=1e-4), (loss_r, ref_r)

    print("KERNEL_OK")
</pallas_src>

<mosaic_0001>
module attributes {stable_mosaic.version = 11 : i64} {
  func.func @kernel(%arg0: i32, %arg1: i32, %arg2: memref<16x128xf32, #tpu.memory_space<vmem>>, %arg3: memref<16x128xf32, #tpu.memory_space<vmem>>, %arg4: memref<40x128xf32, #tpu.memory_space<vmem>>) attributes {dimension_semantics = [#tpu.dimension_semantics<arbitrary>, #tpu.dimension_semantics<arbitrary>], iteration_bounds = array<i64: 1, 1>, scalar_prefetch = 0 : i64, scratch_operands = 0 : i64, tpu.core_type = #tpu.core_type<tc>, window_params = [{transform_indices = @transform_0, window_bounds = array<i64: 16, 128>}, {transform_indices = @transform_1, window_bounds = array<i64: 16, 128>}, {transform_indices = @transform_2, window_bounds = array<i64: 40, 128>}]} {
    %c0_i32 = arith.constant 0 : i32
    %0 = arith.cmpi eq, %arg1, %c0_i32 : i32
    %1 = arith.extui %0 : i1 to i32
    %c0_i32_0 = arith.constant 0 : i32
    %2 = arith.cmpi ne, %1, %c0_i32_0 : i32
    scf.if %2 {
      %cst_23 = arith.constant 0.000000e+00 : f32
      %34 = vector.broadcast %cst_23 : f32 to vector<40x128xf32>
      %c0_24 = arith.constant 0 : index
      %c0_25 = arith.constant 0 : index
      %35 = vector.load %arg4[%c0_24, %c0_25] : memref<40x128xf32, #tpu.memory_space<vmem>>, vector<40x128xf32>
      tpu.vector_store %arg4[%c0_24, %c0_25], %34 {strides = array<i32>} : memref<40x128xf32, #tpu.memory_space<vmem>>, vector<40x128xf32>,
    } else {
    }
    %c0 = arith.constant 0 : index
    %c0_1 = arith.constant 0 : index
    %3 = vector.load %arg4[%c0, %c0_1] : memref<40x128xf32, #tpu.memory_space<vmem>>, vector<8x128xf32>
    %c8 = arith.constant 8 : index
    %c0_2 = arith.constant 0 : index
    %4 = vector.load %arg4[%c8, %c0_2] : memref<40x128xf32, #tpu.memory_space<vmem>>, vector<8x128xf32>
    %c16 = arith.constant 16 : index
    %c0_3 = arith.constant 0 : index
    %5 = vector.load %arg4[%c16, %c0_3] : memref<40x128xf32, #tpu.memory_space<vmem>>, vector<8x128xf32>
    %c24 = arith.constant 24 : index
    %c0_4 = arith.constant 0 : index
    %6 = vector.load %arg4[%c24, %c0_4] : memref<40x128xf32, #tpu.memory_space<vmem>>, vector<8x128xf32>
    %c32 = arith.constant 32 : index
    %c0_5 = arith.constant 0 : index
    %7 = vector.load %arg4[%c32, %c0_5] : memref<40x128xf32, #tpu.memory_space<vmem>>, vector<8x128xf32>
    %c0_i32_6 = arith.constant 0 : i32
    %c16_i32 = arith.constant 16 : i32
    %8 = arith.muli %c0_i32_6, %c16_i32 : i32
    %9 = tpu.assume_multiple %8, 16 : i32
    %10 = arith.index_cast %9 : i32 to index
    %c0_7 = arith.constant 0 : index
    %11 = vector.load %arg2[%10, %c0_7] : memref<16x128xf32, #tpu.memory_space<vmem>>, vector<16x128xf32>
    %12 = arith.index_cast %9 : i32 to index
    %c0_8 = arith.constant 0 : index
    %13 = vector.load %arg3[%12, %c0_8] : memref<16x128xf32, #tpu.memory_space<vmem>>, vector<16x128xf32>
    %14 = vector.shape_cast %11 : vector<16x128xf32> to vector<2x8x128xf32>
    %15 = vector.shape_cast %13 : vector<16x128xf32> to vector<2x8x128xf32>
    %cst = arith.constant dense<0.000000e+00> : vector<8x128xf32>
    %16 = vector.multi_reduction <add>, %14, %cst [0] : vector<2x8x128xf32> to vector<8x128xf32>
    %17 = arith.addf %3, %16 : vector<8x128xf32>
    %cst_9 = arith.constant dense<0.000000e+00> : vector<8x128xf32>
    %18 = vector.multi_reduction <add>, %15, %cst_9 [0] : vector<2x8x128xf32> to vector<8x128xf32>
    %19 = arith.addf %4, %18 : vector<8x128xf32>
    %20 = arith.mulf %14, %15 : vector<2x8x128xf32>
    %cst_10 = arith.constant dense<0.000000e+00> : vector<8x128xf32>
    %21 = vector.multi_reduction <add>, %20, %cst_10 [0] : vector<2x8x128xf32> to vector<8x128xf32>
    %22 = arith.addf %5, %21 : vector<8x128xf32>
    %23 = arith.mulf %14, %14 : vector<2x8x128xf32>
    %cst_11 = arith.constant dense<0.000000e+00> : vector<8x128xf32>
    %24 = vector.multi_reduction <add>, %23, %cst_11 [0] : vector<2x8x128xf32> to vector<8x128xf32>
    %25 = arith.addf %6, %24 : vector<8x128xf32>
    %26 = arith.mulf %15, %15 : vector<2x8x128xf32>
    %cst_12 = arith.constant dense<0.000000e+00> : vector<8x128xf32>
    %27 = vector.multi_reduction <add>, %26, %cst_12 [0] : vector<2x8x128xf32> to vector<8x128xf32>
    %28 = arith.addf %7, %27 : vector<8x128xf32>
    %c1_i32 = arith.constant 1 : i32
    %c0_13 = arith.constant 0 : index
    %c0_14 = arith.constant 0 : index
    %29 = vector.load %arg4[%c0_13, %c0_14] : memref<40x128xf32, #tpu.memory_space<vmem>>, vector<8x128xf32>
    tpu.vector_store %arg4[%c0_13, %c0_14], %17 {strides = array<i32>} : memref<40x128xf32, #tpu.memory_space<vmem>>, vector<8x128xf32>,
    %c8_15 = arith.constant 8 : index
    %c0_16 = arith.constant 0 : index
    %30 = vector.load %arg4[%c8_15, %c0_16] : memref<40x128xf32, #tpu.memory_space<vmem>>, vector<8x128xf32>
    tpu.vector_store %arg4[%c8_15, %c0_16], %19 {strides = array<i32>} : memref<40x128xf32, #tpu.memory_space<vmem>>, vector<8x128xf32>,
    %c16_17 = arith.constant 16 : index
    %c0_18 = arith.constant 0 : index
    %31 = vector.load %arg4[%c16_17, %c0_18] : memref<40x128xf32, #tpu.memory_space<vmem>>, vector<8x128xf32>
    tpu.vector_store %arg4[%c16_17, %c0_18], %22 {strides = array<i32>} : memref<40x128xf32, #tpu.memory_space<vmem>>, vector<8x128xf32>,
    %c24_19 = arith.constant 24 : index
    %c0_20 = arith.constant 0 : index
    %32 = vector.load %arg4[%c24_19, %c0_20] : memref<40x128xf32, #tpu.memory_space<vmem>>, vector<8x128xf32>
    tpu.vector_store %arg4[%c24_19, %c0_20], %25 {strides = array<i32>} : memref<40x128xf32, #tpu.memory_space<vmem>>, vector<8x128xf32>,
    %c32_21 = arith.constant 32 : index
    %c0_22 = arith.constant 0 : index
    %33 = vector.load %arg4[%c32_21, %c0_22] : memref<40x128xf32, #tpu.memory_space<vmem>>, vector<8x128xf32>
    tpu.vector_store %arg4[%c32_21, %c0_22], %28 {strides = array<i32>} : memref<40x128xf32, #tpu.memory_space<vmem>>, vector<8x128xf32>,
    return
  }
  func.func @transform_0(%arg0: i32, %arg1: i32) -> (i32, i32) {
    %c1_i32 = arith.constant 1 : i32
    %0 = arith.muli %arg0, %c1_i32 : i32
    %1 = arith.addi %0, %arg1 : i32
    %c0_i32 = arith.constant 0 : i32
    %2 = arith.minsi %1, %c0_i32 : i32
    %c0_i32_0 = arith.constant 0 : i32
    %c0_i32_1 = arith.constant 0 : i32
    return %2, %c0_i32_0 : i32, i32
  }
  func.func @transform_1(%arg0: i32, %arg1: i32) -> (i32, i32) {
    %c1_i32 = arith.constant 1 : i32
    %0 = arith.muli %arg0, %c1_i32 : i32
    %1 = arith.addi %0, %arg1 : i32
    %c0_i32 = arith.constant 0 : i32
    %2 = arith.minsi %1, %c0_i32 : i32
    %c0_i32_0 = arith.constant 0 : i32
    %c0_i32_1 = arith.constant 0 : i32
    return %2, %c0_i32_0 : i32, i32
  }
  func.func @transform_2(%arg0: i32, %arg1: i32) -> (i32, i32) {
    %c0_i32 = arith.constant 0 : i32
    %c0_i32_0 = arith.constant 0 : i32
    return %arg0, %c0_i32 : i32, i32
  }
}

</mosaic_0001>

<llo_original>
// kernel: tpu_custom_call.1
$region0: #{tpu_custom_call.1}
  #allocation0 [shape = 'u32[]', space=smem, size = 0x4, offset = 0x4, fixed_abs, tag = 'smem constant byte address 0x4 - core index']
  #allocation1 [shape = 'u32[144,128]{1,0:T(1,128)}', space=vmem, size = 0x12000, scoped, tag = 'internal scratch']
  %s0 = inlined_call_operand.hbm [shape: f32[16,128], index: 0, kind: input, shape index: {}]
  %s1 = inlined_call_operand.hbm [shape: f32[16,128], index: 1, kind: input, shape index: {}]
  %s2 = inlined_call_operand.hbm [shape: f32[40,128], index: 2, kind: output, shape index: {}]
  %s3 = sld [smem:[#allocation0]]
  $region30: #{tpu_custom_call.1} parent=0
    _
  %s5 = ssub.s32 1, %s3
  %s6 = scalar_select 0, %s5, %s3
  $region1: #{tpu_custom_call.1} parent=0
    #allocation2 [shape = 'u8[8192]{0}', space=vmem, size = 0x2000, scoped, tag = 'input window, operand 0, single buffered']
    #allocation3 [shape = 's32[1]{0}', space=sflag, size = 0x4, scoped, tag = 'scoped memory for tpu_custom_call.1']
    #allocation4 [shape = 's32[1]{0}', space=sflag, size = 0x4, scoped, tag = 'scoped memory for tpu_custom_call.1']
    #allocation5 [shape = 'u8[8192]{0}', space=vmem, size = 0x2000, scoped, tag = 'input window, operand 1, single buffered']
    #allocation6 [shape = 's32[1]{0}', space=sflag, size = 0x4, scoped, tag = 'scoped memory for tpu_custom_call.1']
    #allocation7 [shape = 'u8[20480]{0}', space=vmem, size = 0x5000, scoped, tag = 'output window, operand 0, single buffered']
    %7 = vsyncpa [#allocation3], 0
    %8 = vsyncpa [#allocation6], 0
    %9 = vsyncpa [#allocation4], 0
    // Predicated region
    $region2: #{tpu_custom_call.1} parent=1 // pred_check
      _
    $region3: #{tpu_custom_call.1} parent=1 // pred_check_branch
      %11 = sbr.rel (0) target = $region5
    $region4: #{tpu_custom_call.1} parent=1 // pred_region
      %s12 = sadd.s32 0, 0
      %p13 = scmp.lt.s32.totalorder %s12, 0
      %s14 = scalar_select %p13, %s12, 0
      %s15 = smul.u32 2, %s14
      %s17 = ssub.s32 256, 256
      %18 = vsyncadd [#allocation3], %s17
      %s19 = smul.addr %s15, 128
      %s20 = scalar_lea.hbm %s0, %s19
      %s21 = sshll.u32 [#allocation2], 4
      %s22 = int_to_ptr.vmem [resolvable:$true] %s21
      %27 = dma.hbm_to_vmem [thread:$0]  %s20, 256, %s22, [#allocation3], 128, 128, 8
    $region5: #{tpu_custom_call.1} parent=1 // pred_fallthru
      _
    // Predicated region
    $region6: #{tpu_custom_call.1} parent=1 // pred_check
      _
    $region7: #{tpu_custom_call.1} parent=1 // pred_check_branch
      %29 = sbr.rel (0) target = $region9
    $region8: #{tpu_custom_call.1} parent=1 // pred_region
      %s30 = sadd.s32 0, 0
      %p31 = scmp.lt.s32.totalorder %s30, 0
      %s32 = scalar_select %p31, %s30, 0
      %s33 = smul.u32 2, %s32
      %s35 = ssub.s32 256, 256
      %36 = vsyncadd [#allocation6], %s35
      %s37 = smul.addr %s33, 128
      %s38 = scalar_lea.hbm %s1, %s37
      %s39 = sshll.u32 [#allocation5], 4
      %s40 = int_to_ptr.vmem [resolvable:$true] %s39
      %45 = dma.hbm_to_vmem [thread:$0]  %s38, 256, %s40, [#allocation6], 128, 128, 8
    $region9: #{tpu_custom_call.1} parent=1 // pred_fallthru
      _
    // Predicated region
    $region10: #{tpu_custom_call.1} parent=1 // pred_check
      _
    $region11: #{tpu_custom_call.1} parent=1 // pred_check_branch
      %47 = sbr.rel (0) target = $region13
    $region12: #{tpu_custom_call.1} parent=1 // pred_region
      %48 = dma.done [#allocation3], 256
    $region13: #{tpu_custom_call.1} parent=1 // pred_fallthru
      _
    // Predicated region
    $region14: #{tpu_custom_call.1} parent=1 // pred_check
      _
    $region15: #{tpu_custom_call.1} parent=1 // pred_check_branch
      %50 = sbr.rel (0) target = $region17
    $region16: #{tpu_custom_call.1} parent=1 // pred_region
      %51 = dma.done [#allocation6], 256
    $region17: #{tpu_custom_call.1} parent=1 // pred_fallthru
      _
    %s52 = sadd.s32 0, 0
    %p53 = scmp.lt.s32.totalorder %s52, 0
    %s54 = scalar_select %p53, %s52, 0
    %s55 = smul.u32 2, %s54
    %s56 = sadd.s32 0, 0
    %p57 = scmp.lt.s32.totalorder %s56, 0
    %s58 = scalar_select %p57, %s56, 0
    %s59 = smul.u32 2, %s58
    %p60 = scmp.eq.s32.totalorder 0, 0
    // Predicated region
    $region18: #{tpu_custom_call.1} parent=1 // pred_check
      %p61 = pneg %p60
    $region19: #{tpu_custom_call.1} parent=1 // pred_check_branch
      %63 = sbr.rel (%p61) target = $region21
    $region20: #{tpu_custom_call.1} parent=1 // pred_region
      %64 = vst [vmem:[#allocation7] sm:$0xff] 0.0
      %65 = vst [vmem:[#allocation7 + $0x8] sm:$0xff] 0.0
      %66 = vst [vmem:[#allocation7 + $0x10] sm:$0xff] 0.0
      %67 = vst [vmem:[#allocation7 + $0x18] sm:$0xff] 0.0
      %68 = vst [vmem:[#allocation7 + $0x20] sm:$0xff] 0.0
    $region21: #{tpu_custom_call.1} parent=1 // pred_fallthru
      _
    %v69 = vld [vmem:[#allocation7] sm:$0xff]
    %v70 = vld [vmem:[#allocation7 + $0x8] sm:$0xff]
    %v71 = vld [vmem:[#allocation7 + $0x10] sm:$0xff]
    %v72 = vld [vmem:[#allocation7 + $0x18] sm:$0xff]
    %v73 = vld [vmem:[#allocation7 + $0x20] sm:$0xff]
    %v74 = vld [vmem:[#allocation2] sm:$0xff]
    %v75 = vld [vmem:[#allocation2 + $0x8] sm:$0xff]
    %v76 = vld [vmem:[#allocation5] sm:$0xff]
    %v77 = vld [vmem:[#allocation5 + $0x8] sm:$0xff]
    %v78 = vadd.f32 %v74, %v75
    %v79 = vadd.f32 %v69, %v78
    %v80 = vadd.f32 %v76, %v77
    %v81 = vadd.f32 %v70, %v80
    %v82 = vmul.f32 %v74, %v76
    %v83 = vmul.f32 %v75, %v77
    %v84 = vadd.f32 %v82, %v83
    %v85 = vadd.f32 %v71, %v84
    %v86 = vmul.f32 %v74, %v74
    %v87 = vmul.f32 %v75, %v75
    %v88 = vadd.f32 %v86, %v87
    %v89 = vadd.f32 %v72, %v88
    %v90 = vmul.f32 %v76, %v76
    %v91 = vmul.f32 %v77, %v77
    %v92 = vadd.f32 %v90, %v91
    %v93 = vadd.f32 %v73, %v92
    %94 = vst [vmem:[#allocation7] sm:$0xff] %v79
    %95 = vst [vmem:[#allocation7 + $0x8] sm:$0xff] %v81
    %96 = vst [vmem:[#allocation7 + $0x10] sm:$0xff] %v85
    %97 = vst [vmem:[#allocation7 + $0x18] sm:$0xff] %v89
    %98 = vst [vmem:[#allocation7 + $0x20] sm:$0xff] %v93
    // Predicated region
    $region22: #{tpu_custom_call.1} parent=1 // pred_check
      _
    $region23: #{tpu_custom_call.1} parent=1 // pred_check_branch
      %100 = sbr.rel (0) target = $region25
    $region24: #{tpu_custom_call.1} parent=1 // pred_region
      %s102 = ssub.s32 640, 640
      %103 = vsyncadd [#allocation4], %s102
      %s104 = sshll.u32 [#allocation7], 4
      %s105 = int_to_ptr.vmem [resolvable:$true] %s104
      %110 = dma.vmem_to_hbm [thread:$0]  %s105, 640, %s2, [#allocation4], 128, 128, 8
    $region25: #{tpu_custom_call.1} parent=1 // pred_fallthru
      _
    // Predicated region
    $region26: #{tpu_custom_call.1} parent=1 // pred_check
      _
    $region27: #{tpu_custom_call.1} parent=1 // pred_check_branch
      %112 = sbr.rel (0) target = $region29
    $region28: #{tpu_custom_call.1} parent=1 // pred_region
      %113 = dma.done [#allocation4], 640
    $region29: #{tpu_custom_call.1} parent=1 // pred_fallthru
      _
    %114 = vsyncpa [#allocation3], 1
    %115 = vsyncpa [#allocation6], 1
    %116 = vsyncpa [#allocation4], 1

</llo_original>
